<compile_context>
chip_gen: v5e
topology: v5e:2x2
jax: 0.10.0
libtpu: 0.0.40
codegen_flags: <defaults>
</compile_context>

<pallas_src>
import functools

import jax
import jax.numpy as jnp
from jax.experimental import pallas as pl
from jax.experimental.pallas import tpu as pltpu


def _round_up(x, m):
    return ((x + m - 1) // m) * m


def _round_down(x, m):
    return (x // m) * m


# --------------------------------------------------------------------------
# Kernels
# --------------------------------------------------------------------------
def _pool_kernel_single(x_ref, o_ref, *, inv_hw):
    # One block covers the full spatial extent: reduce in one shot.
    # Accumulate in f32 without materialising a full f32 copy of the tile.
    s = jnp.sum(x_ref[...], axis=-1, keepdims=True, dtype=jnp.float32)
    o_ref[...] = (s * inv_hw).astype(o_ref.dtype)


def _accumulate_strips(x, acc_ref, nstrips):
    # Static 128-wide slices pick whole vreg columns -> no relayout; the
    # steady state is just per-lane VPU adds into the (br, 128) accumulator.
    acc = acc_ref[...]
    for s in range(nstrips):
        acc = acc + x[:, s * 128:(s + 1) * 128].astype(jnp.float32)
    acc_ref[...] = acc


def _pool_kernel_tiled(x_ref, o_ref, acc_ref, *, inv_hw, hw, hw_tile, ragged):
    # x_ref:   (br, hw_tile) input block
    # o_ref:   (br, 1) output block (same block across the reduction axis)
    # acc_ref: (br, 128) lane-dense f32 accumulator, resident across HW axis
    k = pl.program_id(1)
    last = pl.num_programs(1) - 1
    nstrips = hw_tile // 128

    @pl.when(k == 0)
    def _():
        acc_ref[...] = jnp.zeros_like(acc_ref)

    if ragged:
        # Only the last HW step sticks out past the array: keep the mask off
        # the steady-state path and only pay for it once.
        @pl.when(k != last)
        def _():
            _accumulate_strips(x_ref[...], acc_ref, nstrips)

        @pl.when(k == last)
        def _():
            xv = x_ref[...]
            col = jax.lax.broadcasted_iota(jnp.int32, xv.shape, 1) + k * hw_tile
            xv = jnp.where(col < hw, xv, jnp.zeros_like(xv))
            _accumulate_strips(xv, acc_ref, nstrips)
    else:
        _accumulate_strips(x_ref[...], acc_ref, nstrips)

    @pl.when(k == last)
    def _():
        # Single cross-lane (XLU) reduce + scale, once per row tile.
        total = jnp.sum(acc_ref[...], axis=-1, keepdims=True)
        o_ref[...] = (total * inv_hw).astype(o_ref.dtype)


# --------------------------------------------------------------------------
# Wrapper
# --------------------------------------------------------------------------
def global_pooling_2d(
    x,
    *,
    block_budget_bytes=8 * 1024 * 1024,   # per-block budget (pre double-buffer)
    vmem_limit_bytes=32 * 1024 * 1024,    # >= 2*budget; fits v5e/v6e/v7x
    max_hw_tile=4096,                     # keeps the strip unroll <= 32 adds
):
    """Global average pool over the spatial dims of an NCHW array -> (N, C)."""
    n, c, h, w = x.shape
    hw = h * w
    rows = n * c
    x2 = x.reshape(rows, hw)  # contiguous reshape, free in the glue

    itemsize = jnp.dtype(x.dtype).itemsize
    lane_hw = _round_up(hw, 128)          # lane-padded width of one full row
    inv_hw = 1.0 / hw

    def cap_rows_for_megacore(br):
        # Keep >= 2 row tiles when possible so v7x shards across its 2 TCs.
        if rows >= 16:
            br = min(br, max(8, _round_down(rows // 2, 8)))
        return br

    cost = pl.CostEstimate(
        flops=rows * hw,
        transcendentals=0,
        bytes_accessed=rows * hw * itemsize + rows * itemsize,
    )

    if 8 * lane_hw * itemsize <= block_budget_bytes:
        # ---------- Fast path: whole spatial extent in one block ----------
        if rows <= 8:
            br = rows
        else:
            br = min(
                rows,
                max(8, _round_down(block_budget_bytes // (lane_hw * itemsize), 8)),
            )
            br = cap_rows_for_megacore(br)
        grid = (pl.cdiv(rows, br),)

        out = pl.pallas_call(
            functools.partial(_pool_kernel_single, inv_hw=inv_hw),
            out_shape=jax.ShapeDtypeStruct((rows, 1), x.dtype),
            grid_spec=pltpu.PrefetchScalarGridSpec(
                num_scalar_prefetch=0,
                grid=grid,
                in_specs=[pl.BlockSpec((br, hw), lambda i: (i, 0))],
                out_specs=pl.BlockSpec((br, 1), lambda i: (i, 0)),
            ),
            compiler_params=pltpu.CompilerParams(
                dimension_semantics=("parallel",),
                vmem_limit_bytes=vmem_limit_bytes,
            ),
            cost_estimate=cost,
        )(x2)
    else:
        # ---------- Tiled path: HW split across the last grid axis ----------
        hw_tile = _round_down(
            min(hw, max_hw_tile, block_budget_bytes // (8 * itemsize)), 128
        )
        hw_tile = max(hw_tile, 128)
        # Prefer a 128-multiple that exactly divides HW (no ragged tail), as
        # long as it does not shrink the tile below half its target size.
        for t in range(hw_tile, hw_tile // 2 - 1, -128):
            if t > 0 and hw % t == 0:
                hw_tile = t
                break
        ragged = (hw % hw_tile) != 0

        if rows <= 8:
            br = rows
        else:
            br = min(
                rows,
                max(8, _round_down(block_budget_bytes // (hw_tile * itemsize), 8)),
            )
            br = cap_rows_for_megacore(br)
        grid = (pl.cdiv(rows, br), pl.cdiv(hw, hw_tile))

        out = pl.pallas_call(
            functools.partial(
                _pool_kernel_tiled,
                inv_hw=inv_hw, hw=hw, hw_tile=hw_tile, ragged=ragged,
            ),
            out_shape=jax.ShapeDtypeStruct((rows, 1), x.dtype),
            grid_spec=pltpu.PrefetchScalarGridSpec(
                num_scalar_prefetch=0,
                grid=grid,
                in_specs=[pl.BlockSpec((br, hw_tile), lambda i, k: (i, k))],
                out_specs=pl.BlockSpec((br, 1), lambda i, k: (i, 0)),
                scratch_shapes=[pltpu.VMEM((br, 128), jnp.float32)],
            ),
            compiler_params=pltpu.CompilerParams(
                dimension_semantics=("parallel", "arbitrary"),
                vmem_limit_bytes=vmem_limit_bytes,
            ),
            cost_estimate=cost,
        )(x2)

    return out.reshape(n, c)


if __name__ == "__main__":
    key = jax.random.PRNGKey(0)

    # Small shape consistent with the module's forward: NCHW input.
    N, C, H, W = 2, 4, 16, 16
    x = jax.random.normal(key, (N, C, H, W), dtype=jnp.float32)

    out = jax.block_until_ready(global_pooling_2d(x))
    ref = jnp.mean(x.reshape(N, C, -1), axis=2)
    assert out.shape == (N, C), out.shape
    assert jnp.allclose(out, ref, atol=1e-5, rtol=1e-5), "fast-path mismatch"

    # Also exercise the HW-tiled path (incl. ragged last-step masking) by
    # forcing a tiny per-block budget. HW = 16*25 = 400 is not a multiple of
    # the 256-wide spatial tile, so the last reduction step is masked.
    H2, W2 = 16, 25
    x2 = jax.random.normal(jax.random.PRNGKey(1), (N, C, H2, W2), dtype=jnp.float32)
    out2 = jax.block_until_ready(
        global_pooling_2d(x2, block_budget_bytes=8 * 1024)
    )
    ref2 = jnp.mean(x2.reshape(N, C, -1), axis=2)
    assert out2.shape == (N, C), out2.shape
    assert jnp.allclose(out2, ref2, atol=1e-5, rtol=1e-5), "tiled-path mismatch"

    print("KERNEL_OK")
</pallas_src>

<mosaic_0001>
module attributes {stable_mosaic.version = 11 : i64} {
  func.func @_pool_kernel_single(%arg0: i32, %arg1: memref<8x256xf32, #tpu.memory_space<vmem>>, %arg2: memref<8x1xf32, #tpu.memory_space<vmem>>) attributes {dimension_semantics = [#tpu.dimension_semantics<parallel>], iteration_bounds = array<i64: 1>, scalar_prefetch = 0 : i64, scratch_operands = 0 : i64, tpu.core_type = #tpu.core_type<tc>, window_params = [{transform_indices = @transform_0, window_bounds = array<i64: 8, 256>}, {transform_indices = @transform_1, window_bounds = array<i64: 8, 1>}]} {
    %c0 = arith.constant 0 : index
    %c0_0 = arith.constant 0 : index
    %0 = vector.load %arg1[%c0, %c0_0] : memref<8x256xf32, #tpu.memory_space<vmem>>, vector<8x256xf32>
    %cst = arith.constant dense<0.000000e+00> : vector<8xf32>
    %1 = vector.multi_reduction <add>, %0, %cst [1] : vector<8x256xf32> to vector<8xf32>
    %2 = vector.shape_cast %1 : vector<8xf32> to vector<8x1xf32>
    %cst_1 = arith.constant 3.906250e-03 : f32
    %3 = vector.broadcast %cst_1 : f32 to vector<8x1xf32>
    %4 = arith.mulf %2, %3 : vector<8x1xf32>
    %c0_2 = arith.constant 0 : index
    %c0_3 = arith.constant 0 : index
    %5 = vector.load %arg2[%c0_2, %c0_3] : memref<8x1xf32, #tpu.memory_space<vmem>>, vector<8x1xf32>
    tpu.vector_store %arg2[%c0_2, %c0_3], %4 {strides = array<i32>} : memref<8x1xf32, #tpu.memory_space<vmem>>, vector<8x1xf32>,
    return
  }
  func.func @transform_0(%arg0: i32) -> (i32, i32) {
    %c0_i32 = arith.constant 0 : i32
    %c0_i32_0 = arith.constant 0 : i32
    return %arg0, %c0_i32 : i32, i32
  }
  func.func @transform_1(%arg0: i32) -> (i32, i32) {
    %c0_i32 = arith.constant 0 : i32
    %c0_i32_0 = arith.constant 0 : i32
    return %arg0, %c0_i32 : i32, i32
  }
}

</mosaic_0001>

<llo_original>
// kernel: tpu_custom_call.1
$region0: #{tpu_custom_call.1}
  #allocation0 [shape = 'u32[]', space=smem, size = 0x4, offset = 0x4, fixed_abs, tag = 'smem constant byte address 0x4 - core index']
  #allocation1 [shape = 'u32[72,128]{1,0:T(1,128)}', space=vmem, size = 0x9000, scoped, tag = 'internal scratch']
  %s0 = inlined_call_operand.hbm [shape: f32[8,256], index: 0, kind: input, shape index: {}]
  %s1 = inlined_call_operand.vmem [shape: f32[8,1], index: 1, kind: output, shape index: {}]
  %s2 = sld [smem:[#allocation0]]
  $region18: #{tpu_custom_call.1} parent=0
    _
  %s4 = ssub.s32 1, %s2
  %s5 = scalar_select 0, %s4, %s2
  $region1: #{tpu_custom_call.1} parent=0
    #allocation2 [shape = 'u8[8192]{0}', space=vmem, size = 0x2000, scoped, tag = 'input window, operand 0, single buffered']
    #allocation3 [shape = 's32[1]{0}', space=sflag, size = 0x4, scoped, tag = 'scoped memory for tpu_custom_call.1']
    %6 = vsyncpa [#allocation3], 0
    // Predicated region
    $region2: #{tpu_custom_call.1} parent=1 // pred_check
      _
    $region3: #{tpu_custom_call.1} parent=1 // pred_check_branch
      %8 = sbr.rel (0) target = $region5
    $region4: #{tpu_custom_call.1} parent=1 // pred_region
      %10 = vsyncadd [#allocation3], 0
      %s12 = sshll.u32 %s0, 4
      %s13 = int_to_ptr.hbm [resolvable:$true] %s12
      %s14 = sshll.u32 [#allocation2], 4
      %s15 = int_to_ptr.vmem [resolvable:$true] %s14
      %17 = dma.hbm_to_vmem [thread:$0]  %s13, 256, %s15, [#allocation3]
    $region5: #{tpu_custom_call.1} parent=1 // pred_fallthru
      _
    // Predicated region
    $region6: #{tpu_custom_call.1} parent=1 // pred_check
      _
    $region7: #{tpu_custom_call.1} parent=1 // pred_check_branch
      %19 = sbr.rel (0) target = $region9
    $region8: #{tpu_custom_call.1} parent=1 // pred_region
      %21 = dma.done [#allocation3], 256
    $region9: #{tpu_custom_call.1} parent=1 // pred_fallthru
      _
    %v22 = vld [vmem:[#allocation2] sm:$0xff]
    %v23 = vld [vmem:[#allocation2 + $0x8] sm:$0xff]
    %v24 = vadd.f32 %v22, %v23
    %25 = vadd.xlane.f32.xlu0 %v24
    %v26 = vpop.xlane.xlu0 %25
    %v27 = vmul.f32 %v26, 0.00390625
    %vm28 = vcmask 7168
    %29 = vst.msk [vmem:[%s1] sm:$0xff] %vm28, %v27
    // Predicated region
    $region10: #{tpu_custom_call.1} parent=1 // pred_check
      _
    $region11: #{tpu_custom_call.1} parent=1 // pred_check_branch
      %31 = sbr.rel (0) target = $region13
    $region12: #{tpu_custom_call.1} parent=1 // pred_region
      _
    $region13: #{tpu_custom_call.1} parent=1 // pred_fallthru
      _
    // Predicated region
    $region14: #{tpu_custom_call.1} parent=1 // pred_check
      _
    $region15: #{tpu_custom_call.1} parent=1 // pred_check_branch
      %33 = sbr.rel (0) target = $region17
    $region16: #{tpu_custom_call.1} parent=1 // pred_region
      _
    $region17: #{tpu_custom_call.1} parent=1 // pred_fallthru
      _
    %34 = vsyncpa [#allocation3], 1

</llo_original>
